<compile_context>
chip_gen: v5e
topology: v5e:2x2
jax: 0.10.0
libtpu: 0.0.40
codegen_flags: <defaults>
</compile_context>

<pallas_src>
import functools

import numpy as np
import jax
import jax.numpy as jnp
from jax.experimental import pallas as pl
from jax.experimental.pallas import tpu as pltpu


# Matmul operand dtype. Set to jnp.bfloat16 for ~2-4x MXU throughput on
# v6e/v7x (accumulation stays f32); jnp.float32 keeps exact reference parity.
COMPUTE_DTYPE = jnp.float32

# Explicit scoped-VMEM budget (>= the v6e/v7x default, 2x the v5e default).
_VMEM_LIMIT_BYTES = 32 * 1024 * 1024


# ----------------------------------------------------------------------------
# Host-side constants: centered (i)DFT matrices in 3-plane Karatsuba form.
#   y = M @ x  applies  fftshift( (i)fft( ifftshift(x), norm='ortho') ).
#   planes = [Mr, Mr+Mi, Mi-Mr], so that the complex product M @ X needs only
#     P1 = Mr @ (Xr+Xi); P2 = (Mr+Mi) @ Xi; P3 = (Mi-Mr) @ Xr
#     Yr = P1 - P2;      Yi = P1 + P3
#   (and symmetrically for the right-side multiply X @ N).
#   `scale` folds the scalar SENSE weight into the constant.
# ----------------------------------------------------------------------------
def _karatsuba_dft_planes(n, *, inverse=False, transpose=False, scale=1.0):
    eye = np.eye(n, dtype=np.complex64)
    x = np.fft.ifftshift(eye, axes=0)
    f = (np.fft.ifft if inverse else np.fft.fft)(x, axis=0, norm="ortho")
    m = np.fft.fftshift(f, axes=0)
    if transpose:
        m = m.T
    m = m * scale
    mr = m.real.astype(np.float32)
    mi = m.imag.astype(np.float32)
    planes = np.stack([mr, mr + mi, mi - mr]).astype(np.float32)  # (3, n, n)
    return jnp.asarray(planes, dtype=COMPUTE_DTYPE)


def _dot(a, b):
    return jnp.dot(a.astype(COMPUTE_DTYPE), b.astype(COMPUTE_DTYPE),
                   preferred_element_type=jnp.float32)


# ----------------------------------------------------------------------------
# Forward SENSE kernel: one batch element per grid step, all C coils inside.
#   img_ref  : (1, 2E,  H, W)   planes [0:E]=Re, [E:2E]=Im of the image
#   maps_ref : (1, 2EC, H, W)   per coil c: [c*2E : c*2E+E]=Re, [+E : +2E]=Im
#   mh_ref   : (3, H, H)        Karatsuba planes of (weight * row-DFT matrix)
#   mwt_ref  : (3, W, W)        Karatsuba planes of transposed column-DFT
#   out_ref  : (1, 2C, H, W)    planes [0:C]=Re, [C:2C]=Im of k-space
# ----------------------------------------------------------------------------
def _forward_kernel(img_ref, maps_ref, mh_ref, mwt_ref, out_ref, *, E, C):
    ir = img_ref[0, :E]                          # (E, H, W)
    ii = img_ref[0, E:]
    mh_r, mh_rpi, mh_imr = mh_ref[0], mh_ref[1], mh_ref[2]
    mw_r, mw_rpi, mw_imr = mwt_ref[0], mwt_ref[1], mwt_ref[2]

    ar_parts, ai_parts = [], []
    for c in range(C):                           # static unroll over coils
        mr = maps_ref[0, c * 2 * E: c * 2 * E + E]        # (E, H, W)
        mi = maps_ref[0, c * 2 * E + E: (c + 1) * 2 * E]
        # coil-weighted image: sum_e image_e * maps_{c,e}  (complex multiply)
        xr = jnp.sum(ir * mr - ii * mi, axis=0)           # (H, W)
        xi = jnp.sum(ir * mi + ii * mr, axis=0)
        # row (H-axis) centered DFT — 3-matmul complex product (weight folded)
        p1 = _dot(mh_r, xr + xi)
        p2 = _dot(mh_rpi, xi)
        p3 = _dot(mh_imr, xr)
        ar_parts.append(p1 - p2)
        ai_parts.append(p1 + p3)

    ar = jnp.concatenate(ar_parts, axis=0)       # (C*H, W)
    ai = jnp.concatenate(ai_parts, axis=0)
    # column (W-axis) centered DFT — fused across coils: 3 wide matmuls
    q1 = _dot(ar + ai, mw_r)
    q2 = _dot(ai, mw_rpi)
    q3 = _dot(ar, mw_imr)

    H, W = out_ref.shape[2], out_ref.shape[3]
    out_ref[0, :C] = (q1 - q2).reshape(C, H, W)  # real planes, direct store
    out_ref[0, C:] = (q1 + q3).reshape(C, H, W)  # imag planes, direct store


# ----------------------------------------------------------------------------
# Adjoint SENSE kernel: one batch element per grid step, C reduced in-kernel.
#   ks_ref   : (1, 2C,  H, W)   planes [0:C]=Re, [C:2C]=Im of k-space
#   maps_ref : (1, 2EC, H, W)
#   miwt_ref : (3, W, W)        planes of (weight * transposed column-IDFT)
#   mih_ref  : (3, H, H)        planes of the row-IDFT matrix
#   out_ref  : (1, 2E, H, W)    coil-combined image, [0:E]=Re, [E:2E]=Im
# ----------------------------------------------------------------------------
def _adjoint_kernel(ks_ref, maps_ref, miwt_ref, mih_ref, out_ref, *, E, C):
    H, W = out_ref.shape[2], out_ref.shape[3]
    kr = ks_ref[0, :C].reshape(C * H, W)
    ki = ks_ref[0, C:].reshape(C * H, W)
    mw_r, mw_rpi, mw_imr = miwt_ref[0], miwt_ref[1], miwt_ref[2]
    mh_r, mh_rpi, mh_imr = mih_ref[0], mih_ref[1], mih_ref[2]

    # column (W-axis) centered IDFT (weight folded into the constant),
    # fused across all coils: 3 wide (C*H, W) matmuls.
    q1 = _dot(kr + ki, mw_r)
    q2 = _dot(ki, mw_rpi)
    q3 = _dot(kr, mw_imr)
    br = (q1 - q2).reshape(C, H, W)
    bi = (q1 + q3).reshape(C, H, W)

    acc_r = None
    acc_i = None
    for c in range(C):                           # static unroll over coils
        # row (H-axis) centered IDFT for coil c
        p1 = _dot(mh_r, br[c] + bi[c])
        p2 = _dot(mh_rpi, bi[c])
        p3 = _dot(mh_imr, br[c])
        xr = p1 - p2                             # (H, W)
        xi = p1 + p3
        mr = maps_ref[0, c * 2 * E: c * 2 * E + E]        # (E, H, W)
        mi = maps_ref[0, c * 2 * E + E: (c + 1) * 2 * E]
        # x * conj(maps):  (xr + i xi)(mr - i mi)
        cr = xr[None] * mr + xi[None] * mi
        ci = xi[None] * mr - xr[None] * mi
        acc_r = cr if acc_r is None else acc_r + cr
        acc_i = ci if acc_i is None else acc_i + ci

    out_ref[0, :E] = acc_r                       # direct half stores
    out_ref[0, E:] = acc_i


# ----------------------------------------------------------------------------
# Wrappers (layout plumbing only)
# ----------------------------------------------------------------------------
def _forward_pallas(image, maps, weight):
    B, H, W, E, _ = image.shape
    C = maps.shape[3]
    img_k = jnp.transpose(image, (0, 4, 3, 1, 2)).reshape(B, 2 * E, H, W)
    maps_k = jnp.transpose(maps, (0, 3, 5, 4, 1, 2)).reshape(B, C * 2 * E, H, W)
    # scalar weight folded into the row-DFT constant -> no in-kernel multiply
    mh = _karatsuba_dft_planes(H, inverse=False, scale=weight)
    mwt = _karatsuba_dft_planes(W, inverse=False, transpose=True)

    kernel = functools.partial(_forward_kernel, E=E, C=C)
    out = pl.pallas_call(
        kernel,
        out_shape=jax.ShapeDtypeStruct((B, 2 * C, H, W), jnp.float32),
        grid=(B,),
        in_specs=[
            pl.BlockSpec((1, 2 * E, H, W), lambda b: (b, 0, 0, 0)),
            pl.BlockSpec((1, C * 2 * E, H, W), lambda b: (b, 0, 0, 0)),
            # constant block index -> Pallas keeps the resident copy across steps
            pl.BlockSpec((3, H, H), lambda b: (0, 0, 0)),
            pl.BlockSpec((3, W, W), lambda b: (0, 0, 0)),
        ],
        out_specs=pl.BlockSpec((1, 2 * C, H, W), lambda b: (b, 0, 0, 0)),
        compiler_params=pltpu.CompilerParams(
            dimension_semantics=("parallel",),
            vmem_limit_bytes=_VMEM_LIMIT_BYTES),
    )(img_k, maps_k, mh, mwt)
    out = out.reshape(B, 2, C, H, W)
    return jnp.transpose(out, (0, 3, 4, 2, 1))   # (B, H, W, C, 2)


def _adjoint_pallas(kspace, maps, weight):
    B, H, W, C, _ = kspace.shape
    E = maps.shape[4]
    ks_k = jnp.transpose(kspace, (0, 4, 3, 1, 2)).reshape(B, 2 * C, H, W)
    maps_k = jnp.transpose(maps, (0, 3, 5, 4, 1, 2)).reshape(B, C * 2 * E, H, W)
    miwt = _karatsuba_dft_planes(W, inverse=True, transpose=True, scale=weight)
    mih = _karatsuba_dft_planes(H, inverse=True)

    kernel = functools.partial(_adjoint_kernel, E=E, C=C)
    out = pl.pallas_call(
        kernel,
        out_shape=jax.ShapeDtypeStruct((B, 2 * E, H, W), jnp.float32),
        grid=(B,),
        in_specs=[
            pl.BlockSpec((1, 2 * C, H, W), lambda b: (b, 0, 0, 0)),
            pl.BlockSpec((1, C * 2 * E, H, W), lambda b: (b, 0, 0, 0)),
            pl.BlockSpec((3, W, W), lambda b: (0, 0, 0)),
            pl.BlockSpec((3, H, H), lambda b: (0, 0, 0)),
        ],
        out_specs=pl.BlockSpec((1, 2 * E, H, W), lambda b: (b, 0, 0, 0)),
        compiler_params=pltpu.CompilerParams(
            dimension_semantics=("parallel",),
            vmem_limit_bytes=_VMEM_LIMIT_BYTES),
    )(ks_k, maps_k, miwt, mih)
    out = out.reshape(B, 2, E, H, W)
    return jnp.transpose(out, (0, 3, 4, 2, 1))   # (B, H, W, E, 2)


sense_forward = jax.jit(_forward_pallas, static_argnums=(2,))
sense_adjoint = jax.jit(_adjoint_pallas, static_argnums=(2,))


class SenseModel:
    """Pallas-backed equivalent of the PyTorch SenseModel."""

    def __init__(self, maps, coord=None, weights=None):
        # TODO(synk): non-Cartesian `coord` (NUFFT) path is not implemented.
        self.maps = maps
        self.weights = 1.0 if weights is None else weights

    def __call__(self, input, adjoint=False):
        w = self.weights
        is_scalar = isinstance(w, (int, float)) or getattr(w, "ndim", None) == 0
        if adjoint:
            if is_scalar:
                return sense_adjoint(input, self.maps, float(w))
            # TODO(synk): tensor-valued weights (sampling mask) are applied as a
            # plain-JAX elementwise multiply outside the kernel; move in-kernel
            # (multiply before the adjoint IDFT) if it ever becomes a bottleneck.
            return sense_adjoint(jnp.asarray(w) * input, self.maps, 1.0)
        if is_scalar:
            return sense_forward(input, self.maps, float(w))
        return jnp.asarray(w) * sense_forward(input, self.maps, 1.0)

    forward = __call__


# ----------------------------------------------------------------------------
# Pure-numpy reference (mirrors the torch code) for the correctness check.
# ----------------------------------------------------------------------------
def _ref_forward(image, maps, weight):
    image = np.asarray(image); maps = np.asarray(maps)
    img_c = image[..., 0] + 1j * image[..., 1]               # (B,H,W,E)
    maps_c = maps[..., 0] + 1j * maps[..., 1]                # (B,H,W,C,E)
    ks = np.sum(img_c[:, :, :, None, :] * maps_c, axis=-1)   # (B,H,W,C)
    ks = np.transpose(ks, (0, 3, 1, 2))
    ks = np.fft.fftshift(
        np.fft.fftn(np.fft.ifftshift(ks, axes=(-2, -1)), axes=(-2, -1), norm="ortho"),
        axes=(-2, -1))
    ks = np.transpose(ks, (0, 2, 3, 1))
    out = np.stack([ks.real, ks.imag], axis=-1)              # (B,H,W,C,2)
    return (np.asarray(weight) * out).astype(np.float32)


def _ref_adjoint(kspace, maps, weight):
    kspace = np.asarray(weight) * np.asarray(kspace)         # (B,H,W,C,2)
    maps = np.asarray(maps)
    ks_c = kspace[..., 0] + 1j * kspace[..., 1]
    ks_c = np.transpose(ks_c, (0, 3, 1, 2))
    im = np.fft.fftshift(
        np.fft.ifftn(np.fft.ifftshift(ks_c, axes=(-2, -1)), axes=(-2, -1), norm="ortho"),
        axes=(-2, -1))
    im = np.transpose(im, (0, 2, 3, 1))                      # (B,H,W,C)
    maps_c = maps[..., 0] + 1j * maps[..., 1]                # (B,H,W,C,E)
    out = np.sum(im[..., None] * np.conj(maps_c), axis=-2)   # (B,H,W,E)
    return np.stack([out.real, out.imag], axis=-1).astype(np.float32)


if __name__ == "__main__":
    B, H, W, C, E = 2, 16, 16, 4, 2
    key = jax.random.PRNGKey(0)
    k1, k2 = jax.random.split(key)
    image = jax.random.normal(k1, (B, H, W, E, 2), jnp.float32)
    maps = jax.random.normal(k2, (B, H, W, C, E, 2), jnp.float32)

    # --- scalar-weight path (weight folded into the DFT constants) ---
    model = SenseModel(maps)
    kspace = jax.block_until_ready(model(image, adjoint=False))
    img_out = jax.block_until_ready(model(kspace, adjoint=True))
    np.testing.assert_allclose(np.asarray(kspace), _ref_forward(image, maps, 1.0),
                               atol=2e-2, rtol=2e-2)
    np.testing.assert_allclose(np.asarray(img_out), _ref_adjoint(kspace, maps, 1.0),
                               atol=2e-2, rtol=2e-2)

    # --- tensor-weight (sampling-mask) path ---
    mask = (jax.random.uniform(jax.random.PRNGKey(1), (1, H, W, 1, 1)) > 0.4
            ).astype(jnp.float32)
    model_w = SenseModel(maps, weights=mask)
    kspace_w = jax.block_until_ready(model_w(image, adjoint=False))
    img_w = jax.block_until_ready(model_w(kspace_w, adjoint=True))
    np.testing.assert_allclose(np.asarray(kspace_w),
                               _ref_forward(image, maps, np.asarray(mask)),
                               atol=2e-2, rtol=2e-2)
    np.testing.assert_allclose(np.asarray(img_w),
                               _ref_adjoint(kspace_w, maps, np.asarray(mask)),
                               atol=2e-2, rtol=2e-2)

    print("KERNEL_OK")
</pallas_src>

<mosaic_0001>
module attributes {stable_mosaic.version = 11 : i64} {
  func.func @_forward_kernel(%arg0: i32, %arg1: memref<1x4x16x16xf32, #tpu.memory_space<vmem>>, %arg2: memref<1x16x16x16xf32, #tpu.memory_space<vmem>>, %arg3: memref<3x16x16xf32, #tpu.memory_space<vmem>>, %arg4: memref<3x16x16xf32, #tpu.memory_space<vmem>>, %arg5: memref<1x8x16x16xf32, #tpu.memory_space<vmem>>) attributes {dimension_semantics = [#tpu.dimension_semantics<parallel>], iteration_bounds = array<i64: 2>, scalar_prefetch = 0 : i64, scratch_operands = 0 : i64, tpu.core_type = #tpu.core_type<tc>, window_params = [{transform_indices = @transform_0, window_bounds = array<i64: 1, 4, 16, 16>}, {transform_indices = @transform_1, window_bounds = array<i64: 1, 16, 16, 16>}, {pipeline_mode = #tpu.pipeline_mode<synchronous>, transform_indices = @transform_2, window_bounds = array<i64: 3, 16, 16>}, {pipeline_mode = #tpu.pipeline_mode<synchronous>, transform_indices = @transform_3, window_bounds = array<i64: 3, 16, 16>}, {transform_indices = @transform_4, window_bounds = array<i64: 1, 8, 16, 16>}]} {
    %c0 = arith.constant 0 : index
    %c0_0 = arith.constant 0 : index
    %c0_1 = arith.constant 0 : index
    %c0_2 = arith.constant 0 : index
    %0 = vector.load %arg1[%c0, %c0_0, %c0_1, %c0_2] : memref<1x4x16x16xf32, #tpu.memory_space<vmem>>, vector<1x2x16x16xf32>
    %1 = vector.shape_cast %0 : vector<1x2x16x16xf32> to vector<2x16x16xf32>
    %c0_3 = arith.constant 0 : index
    %c2 = arith.constant 2 : index
    %c0_4 = arith.constant 0 : index
    %c0_5 = arith.constant 0 : index
    %2 = vector.load %arg1[%c0_3, %c2, %c0_4, %c0_5] : memref<1x4x16x16xf32, #tpu.memory_space<vmem>>, vector<1x2x16x16xf32>
    %3 = vector.shape_cast %2 : vector<1x2x16x16xf32> to vector<2x16x16xf32>
    %c0_6 = arith.constant 0 : index
    %c0_7 = arith.constant 0 : index
    %c0_8 = arith.constant 0 : index
    %4 = vector.load %arg3[%c0_6, %c0_7, %c0_8] : memref<3x16x16xf32, #tpu.memory_space<vmem>>, vector<1x16x16xf32>
    %5 = vector.shape_cast %4 : vector<1x16x16xf32> to vector<16x16xf32>
    %c1 = arith.constant 1 : index
    %c0_9 = arith.constant 0 : index
    %c0_10 = arith.constant 0 : index
    %6 = vector.load %arg3[%c1, %c0_9, %c0_10] : memref<3x16x16xf32, #tpu.memory_space<vmem>>, vector<1x16x16xf32>
    %7 = vector.shape_cast %6 : vector<1x16x16xf32> to vector<16x16xf32>
    %c2_11 = arith.constant 2 : index
    %c0_12 = arith.constant 0 : index
    %c0_13 = arith.constant 0 : index
    %8 = vector.load %arg3[%c2_11, %c0_12, %c0_13] : memref<3x16x16xf32, #tpu.memory_space<vmem>>, vector<1x16x16xf32>
    %9 = vector.shape_cast %8 : vector<1x16x16xf32> to vector<16x16xf32>
    %c0_14 = arith.constant 0 : index
    %c0_15 = arith.constant 0 : index
    %c0_16 = arith.constant 0 : index
    %10 = vector.load %arg4[%c0_14, %c0_15, %c0_16] : memref<3x16x16xf32, #tpu.memory_space<vmem>>, vector<1x16x16xf32>
    %11 = vector.shape_cast %10 : vector<1x16x16xf32> to vector<16x16xf32>
    %c1_17 = arith.constant 1 : index
    %c0_18 = arith.constant 0 : index
    %c0_19 = arith.constant 0 : index
    %12 = vector.load %arg4[%c1_17, %c0_18, %c0_19] : memref<3x16x16xf32, #tpu.memory_space<vmem>>, vector<1x16x16xf32>
    %13 = vector.shape_cast %12 : vector<1x16x16xf32> to vector<16x16xf32>
    %c2_20 = arith.constant 2 : index
    %c0_21 = arith.constant 0 : index
    %c0_22 = arith.constant 0 : index
    %14 = vector.load %arg4[%c2_20, %c0_21, %c0_22] : memref<3x16x16xf32, #tpu.memory_space<vmem>>, vector<1x16x16xf32>
    %15 = vector.shape_cast %14 : vector<1x16x16xf32> to vector<16x16xf32>
    %c0_23 = arith.constant 0 : index
    %c0_24 = arith.constant 0 : index
    %c0_25 = arith.constant 0 : index
    %c0_26 = arith.constant 0 : index
    %16 = vector.load %arg2[%c0_23, %c0_24, %c0_25, %c0_26] : memref<1x16x16x16xf32, #tpu.memory_space<vmem>>, vector<1x2x16x16xf32>
    %17 = vector.shape_cast %16 : vector<1x2x16x16xf32> to vector<2x16x16xf32>
    %c0_27 = arith.constant 0 : index
    %c2_28 = arith.constant 2 : index
    %c0_29 = arith.constant 0 : index
    %c0_30 = arith.constant 0 : index
    %18 = vector.load %arg2[%c0_27, %c2_28, %c0_29, %c0_30] : memref<1x16x16x16xf32, #tpu.memory_space<vmem>>, vector<1x2x16x16xf32>
    %19 = vector.shape_cast %18 : vector<1x2x16x16xf32> to vector<2x16x16xf32>
    %20 = arith.mulf %1, %17 : vector<2x16x16xf32>
    %21 = arith.mulf %3, %19 : vector<2x16x16xf32>
    %22 = arith.subf %20, %21 : vector<2x16x16xf32>
    %cst = arith.constant dense<0.000000e+00> : vector<16x16xf32>
    %23 = vector.multi_reduction <add>, %22, %cst [0] : vector<2x16x16xf32> to vector<16x16xf32>
    %24 = arith.mulf %1, %19 : vector<2x16x16xf32>
    %25 = arith.mulf %3, %17 : vector<2x16x16xf32>
    %26 = arith.addf %24, %25 : vector<2x16x16xf32>
    %cst_31 = arith.constant dense<0.000000e+00> : vector<16x16xf32>
    %27 = vector.multi_reduction <add>, %26, %cst_31 [0] : vector<2x16x16xf32> to vector<16x16xf32>
    %28 = arith.addf %23, %27 : vector<16x16xf32>
    %cst_32 = arith.constant dense<0.000000e+00> : vector<16x16xf32>
    %29 = tpu.matmul %5, %28, %cst_32 {dimension_numbers = #tpu.dot_dimension_numbers<[1], [0], [0], [1], [0, 0, 1, 1], [], []>} : vector<16x16xf32>, vector<16x16xf32>, vector<16x16xf32> -> vector<16x16xf32>
    %cst_33 = arith.constant dense<0.000000e+00> : vector<16x16xf32>
    %30 = tpu.matmul %7, %27, %cst_33 {dimension_numbers = #tpu.dot_dimension_numbers<[1], [0], [0], [1], [0, 0, 1, 1], [], []>} : vector<16x16xf32>, vector<16x16xf32>, vector<16x16xf32> -> vector<16x16xf32>
    %cst_34 = arith.constant dense<0.000000e+00> : vector<16x16xf32>
    %31 = tpu.matmul %9, %23, %cst_34 {dimension_numbers = #tpu.dot_dimension_numbers<[1], [0], [0], [1], [0, 0, 1, 1], [], []>} : vector<16x16xf32>, vector<16x16xf32>, vector<16x16xf32> -> vector<16x16xf32>
    %32 = arith.subf %29, %30 : vector<16x16xf32>
    %33 = arith.addf %29, %31 : vector<16x16xf32>
    %c0_35 = arith.constant 0 : index
    %c4 = arith.constant 4 : index
    %c0_36 = arith.constant 0 : index
    %c0_37 = arith.constant 0 : index
    %34 = vector.load %arg2[%c0_35, %c4, %c0_36, %c0_37] : memref<1x16x16x16xf32, #tpu.memory_space<vmem>>, vector<1x2x16x16xf32>
    %35 = vector.shape_cast %34 : vector<1x2x16x16xf32> to vector<2x16x16xf32>
    %c0_38 = arith.constant 0 : index
    %c6 = arith.constant 6 : index
    %c0_39 = arith.constant 0 : index
    %c0_40 = arith.constant 0 : index
    %36 = vector.load %arg2[%c0_38, %c6, %c0_39, %c0_40] : memref<1x16x16x16xf32, #tpu.memory_space<vmem>>, vector<1x2x16x16xf32>
    %37 = vector.shape_cast %36 : vector<1x2x16x16xf32> to vector<2x16x16xf32>
    %38 = arith.mulf %1, %35 : vector<2x16x16xf32>
    %39 = arith.mulf %3, %37 : vector<2x16x16xf32>
    %40 = arith.subf %38, %39 : vector<2x16x16xf32>
    %cst_41 = arith.constant dense<0.000000e+00> : vector<16x16xf32>
    %41 = vector.multi_reduction <add>, %40, %cst_41 [0] : vector<2x16x16xf32> to vector<16x16xf32>
    %42 = arith.mulf %1, %37 : vector<2x16x16xf32>
    %43 = arith.mulf %3, %35 : vector<2x16x16xf32>
    %44 = arith.addf %42, %43 : vector<2x16x16xf32>
    %cst_42 = arith.constant dense<0.000000e+00> : vector<16x16xf32>
    %45 = vector.multi_reduction <add>, %44, %cst_42 [0] : vector<2x16x16xf32> to vector<16x16xf32>
    %46 = arith.addf %41, %45 : vector<16x16xf32>
    %cst_43 = arith.constant dense<0.000000e+00> : vector<16x16xf32>
    %47 = tpu.matmul %5, %46, %cst_43 {dimension_numbers = #tpu.dot_dimension_numbers<[1], [0], [0], [1], [0, 0, 1, 1], [], []>} : vector<16x16xf32>, vector<16x16xf32>, vector<16x16xf32> -> vector<16x16xf32>
    %cst_44 = arith.constant dense<0.000000e+00> : vector<16x16xf32>
    %48 = tpu.matmul %7, %45, %cst_44 {dimension_numbers = #tpu.dot_dimension_numbers<[1], [0], [0], [1], [0, 0, 1, 1], [], []>} : vector<16x16xf32>, vector<16x16xf32>, vector<16x16xf32> -> vector<16x16xf32>
    %cst_45 = arith.constant dense<0.000000e+00> : vector<16x16xf32>
    %49 = tpu.matmul %9, %41, %cst_45 {dimension_numbers = #tpu.dot_dimension_numbers<[1], [0], [0], [1], [0, 0, 1, 1], [], []>} : vector<16x16xf32>, vector<16x16xf32>, vector<16x16xf32> -> vector<16x16xf32>
    %50 = arith.subf %47, %48 : vector<16x16xf32>
    %51 = arith.addf %47, %49 : vector<16x16xf32>
    %c0_46 = arith.constant 0 : index
    %c8 = arith.constant 8 : index
    %c0_47 = arith.constant 0 : index
    %c0_48 = arith.constant 0 : index
    %52 = vector.load %arg2[%c0_46, %c8, %c0_47, %c0_48] : memref<1x16x16x16xf32, #tpu.memory_space<vmem>>, vector<1x2x16x16xf32>
    %53 = vector.shape_cast %52 : vector<1x2x16x16xf32> to vector<2x16x16xf32>
    %c0_49 = arith.constant 0 : index
    %c10 = arith.constant 10 : index
    %c0_50 = arith.constant 0 : index
    %c0_51 = arith.constant 0 : index
    %54 = vector.load %arg2[%c0_49, %c10, %c0_50, %c0_51] : memref<1x16x16x16xf32, #tpu.memory_space<vmem>>, vector<1x2x16x16xf32>
    %55 = vector.shape_cast %54 : vector<1x2x16x16xf32> to vector<2x16x16xf32>
    %56 = arith.mulf %1, %53 : vector<2x16x16xf32>
    %57 = arith.mulf %3, %55 : vector<2x16x16xf32>
    %58 = arith.subf %56, %57 : vector<2x16x16xf32>
    %cst_52 = arith.constant dense<0.000000e+00> : vector<16x16xf32>
    %59 = vector.multi_reduction <add>, %58, %cst_52 [0] : vector<2x16x16xf32> to vector<16x16xf32>
    %60 = arith.mulf %1, %55 : vector<2x16x16xf32>
    %61 = arith.mulf %3, %53 : vector<2x16x16xf32>
    %62 = arith.addf %60, %61 : vector<2x16x16xf32>
    %cst_53 = arith.constant dense<0.000000e+00> : vector<16x16xf32>
    %63 = vector.multi_reduction <add>, %62, %cst_53 [0] : vector<2x16x16xf32> to vector<16x16xf32>
    %64 = arith.addf %59, %63 : vector<16x16xf32>
    %cst_54 = arith.constant dense<0.000000e+00> : vector<16x16xf32>
    %65 = tpu.matmul %5, %64, %cst_54 {dimension_numbers = #tpu.dot_dimension_numbers<[1], [0], [0], [1], [0, 0, 1, 1], [], []>} : vector<16x16xf32>, vector<16x16xf32>, vector<16x16xf32> -> vector<16x16xf32>
    %cst_55 = arith.constant dense<0.000000e+00> : vector<16x16xf32>
    %66 = tpu.matmul %7, %63, %cst_55 {dimension_numbers = #tpu.dot_dimension_numbers<[1], [0], [0], [1], [0, 0, 1, 1], [], []>} : vector<16x16xf32>, vector<16x16xf32>, vector<16x16xf32> -> vector<16x16xf32>
    %cst_56 = arith.constant dense<0.000000e+00> : vector<16x16xf32>
    %67 = tpu.matmul %9, %59, %cst_56 {dimension_numbers = #tpu.dot_dimension_numbers<[1], [0], [0], [1], [0, 0, 1, 1], [], []>} : vector<16x16xf32>, vector<16x16xf32>, vector<16x16xf32> -> vector<16x16xf32>
    %68 = arith.subf %65, %66 : vector<16x16xf32>
    %69 = arith.addf %65, %67 : vector<16x16xf32>
    %c0_57 = arith.constant 0 : index
    %c12 = arith.constant 12 : index
    %c0_58 = arith.constant 0 : index
    %c0_59 = arith.constant 0 : index
    %70 = vector.load %arg2[%c0_57, %c12, %c0_58, %c0_59] : memref<1x16x16x16xf32, #tpu.memory_space<vmem>>, vector<1x2x16x16xf32>
    %71 = vector.shape_cast %70 : vector<1x2x16x16xf32> to vector<2x16x16xf32>
    %c0_60 = arith.constant 0 : index
    %c14 = arith.constant 14 : index
    %c0_61 = arith.constant 0 : index
    %c0_62 = arith.constant 0 : index
    %72 = vector.load %arg2[%c0_60, %c14, %c0_61, %c0_62] : memref<1x16x16x16xf32, #tpu.memory_space<vmem>>, vector<1x2x16x16xf32>
    %73 = vector.shape_cast %72 : vector<1x2x16x16xf32> to vector<2x16x16xf32>
    %74 = arith.mulf %1, %71 : vector<2x16x16xf32>
    %75 = arith.mulf %3, %73 : vector<2x16x16xf32>
    %76 = arith.subf %74, %75 : vector<2x16x16xf32>
    %cst_63 = arith.constant dense<0.000000e+00> : vector<16x16xf32>
    %77 = vector.multi_reduction <add>, %76, %cst_63 [0] : vector<2x16x16xf32> to vector<16x16xf32>
    %78 = arith.mulf %1, %73 : vector<2x16x16xf32>
    %79 = arith.mulf %3, %71 : vector<2x16x16xf32>
    %80 = arith.addf %78, %79 : vector<2x16x16xf32>
    %cst_64 = arith.constant dense<0.000000e+00> : vector<16x16xf32>
    %81 = vector.multi_reduction <add>, %80, %cst_64 [0] : vector<2x16x16xf32> to vector<16x16xf32>
    %82 = arith.addf %77, %81 : vector<16x16xf32>
    %cst_65 = arith.constant dense<0.000000e+00> : vector<16x16xf32>
    %83 = tpu.matmul %5, %82, %cst_65 {dimension_numbers = #tpu.dot_dimension_numbers<[1], [0], [0], [1], [0, 0, 1, 1], [], []>} : vector<16x16xf32>, vector<16x16xf32>, vector<16x16xf32> -> vector<16x16xf32>
    %cst_66 = arith.constant dense<0.000000e+00> : vector<16x16xf32>
    %84 = tpu.matmul %7, %81, %cst_66 {dimension_numbers = #tpu.dot_dimension_numbers<[1], [0], [0], [1], [0, 0, 1, 1], [], []>} : vector<16x16xf32>, vector<16x16xf32>, vector<16x16xf32> -> vector<16x16xf32>
    %cst_67 = arith.constant dense<0.000000e+00> : vector<16x16xf32>
    %85 = tpu.matmul %9, %77, %cst_67 {dimension_numbers = #tpu.dot_dimension_numbers<[1], [0], [0], [1], [0, 0, 1, 1], [], []>} : vector<16x16xf32>, vector<16x16xf32>, vector<16x16xf32> -> vector<16x16xf32>
    %86 = arith.subf %83, %84 : vector<16x16xf32>
    %87 = arith.addf %83, %85 : vector<16x16xf32>
    %88 = tpu.concatenate %32, %50, %68, %86 in 0 : vector<16x16xf32>, vector<16x16xf32>, vector<16x16xf32>, vector<16x16xf32> -> vector<64x16xf32>
    %89 = tpu.concatenate %33, %51, %69, %87 in 0 : vector<16x16xf32>, vector<16x16xf32>, vector<16x16xf32>, vector<16x16xf32> -> vector<64x16xf32>
    %90 = arith.addf %88, %89 : vector<64x16xf32>
    %cst_68 = arith.constant dense<0.000000e+00> : vector<64x16xf32>
    %91 = tpu.matmul %90, %11, %cst_68 {dimension_numbers = #tpu.dot_dimension_numbers<[1], [0], [0], [1], [0, 0, 1, 1], [], []>} : vector<64x16xf32>, vector<16x16xf32>, vector<64x16xf32> -> vector<64x16xf32>
    %cst_69 = arith.constant dense<0.000000e+00> : vector<64x16xf32>
    %92 = tpu.matmul %89, %13, %cst_69 {dimension_numbers = #tpu.dot_dimension_numbers<[1], [0], [0], [1], [0, 0, 1, 1], [], []>} : vector<64x16xf32>, vector<16x16xf32>, vector<64x16xf32> -> vector<64x16xf32>
    %cst_70 = arith.constant dense<0.000000e+00> : vector<64x16xf32>
    %93 = tpu.matmul %88, %15, %cst_70 {dimension_numbers = #tpu.dot_dimension_numbers<[1], [0], [0], [1], [0, 0, 1, 1], [], []>} : vector<64x16xf32>, vector<16x16xf32>, vector<64x16xf32> -> vector<64x16xf32>
    %94 = arith.subf %91, %92 : vector<64x16xf32>
    %95 = vector.shape_cast %94 : vector<64x16xf32> to vector<4x16x16xf32>
    %c0_71 = arith.constant 0 : index
    %c0_72 = arith.constant 0 : index
    %c0_73 = arith.constant 0 : index
    %c0_74 = arith.constant 0 : index
    %96 = vector.load %arg5[%c0_71, %c0_72, %c0_73, %c0_74] : memref<1x8x16x16xf32, #tpu.memory_space<vmem>>, vector<1x4x16x16xf32>
    %97 = vector.shape_cast %96 : vector<1x4x16x16xf32> to vector<4x16x16xf32>
    %98 = vector.shape_cast %95 : vector<4x16x16xf32> to vector<1x4x16x16xf32>
    tpu.vector_store %arg5[%c0_71, %c0_72, %c0_73, %c0_74], %98 {strides = array<i32>} : memref<1x8x16x16xf32, #tpu.memory_space<vmem>>, vector<1x4x16x16xf32>,
    %99 = arith.addf %91, %93 : vector<64x16xf32>
    %100 = vector.shape_cast %99 : vector<64x16xf32> to vector<4x16x16xf32>
    %c0_75 = arith.constant 0 : index
    %c4_76 = arith.constant 4 : index
    %c0_77 = arith.constant 0 : index
    %c0_78 = arith.constant 0 : index
    %101 = vector.load %arg5[%c0_75, %c4_76, %c0_77, %c0_78] : memref<1x8x16x16xf32, #tpu.memory_space<vmem>>, vector<1x4x16x16xf32>
    %102 = vector.shape_cast %101 : vector<1x4x16x16xf32> to vector<4x16x16xf32>
    %103 = vector.shape_cast %100 : vector<4x16x16xf32> to vector<1x4x16x16xf32>
    tpu.vector_store %arg5[%c0_75, %c4_76, %c0_77, %c0_78], %103 {strides = array<i32>} : memref<1x8x16x16xf32, #tpu.memory_space<vmem>>, vector<1x4x16x16xf32>,
    return
  }
  func.func @transform_0(%arg0: i32) -> (i32, i32, i32, i32) {
    %c0_i32 = arith.constant 0 : i32
    %c0_i32_0 = arith.constant 0 : i32
    %c0_i32_1 = arith.constant 0 : i32
    %c0_i32_2 = arith.constant 0 : i32
    return %arg0, %c0_i32, %c0_i32_0, %c0_i32_1 : i32, i32, i32, i32
  }
  func.func @transform_1(%arg0: i32) -> (i32, i32, i32, i32) {
    %c0_i32 = arith.constant 0 : i32
    %c0_i32_0 = arith.constant 0 : i32
    %c0_i32_1 = arith.constant 0 : i32
    %c0_i32_2 = arith.constant 0 : i32
    return %arg0, %c0_i32, %c0_i32_0, %c0_i32_1 : i32, i32, i32, i32
  }
  func.func @transform_2(%arg0: i32) -> (i32, i32, i32) {
    %c0_i32 = arith.constant 0 : i32
    %c0_i32_0 = arith.constant 0 : i32
    %c0_i32_1 = arith.constant 0 : i32
    %c0_i32_2 = arith.constant 0 : i32
    return %c0_i32, %c0_i32_0, %c0_i32_1 : i32, i32, i32
  }
  func.func @transform_3(%arg0: i32) -> (i32, i32, i32) {
    %c0_i32 = arith.constant 0 : i32
    %c0_i32_0 = arith.constant 0 : i32
    %c0_i32_1 = arith.constant 0 : i32
    %c0_i32_2 = arith.constant 0 : i32
    return %c0_i32, %c0_i32_0, %c0_i32_1 : i32, i32, i32
  }
  func.func @transform_4(%arg0: i32) -> (i32, i32, i32, i32) {
    %c0_i32 = arith.constant 0 : i32
    %c0_i32_0 = arith.constant 0 : i32
    %c0_i32_1 = arith.constant 0 : i32
    %c0_i32_2 = arith.constant 0 : i32
    return %arg0, %c0_i32, %c0_i32_0, %c0_i32_1 : i32, i32, i32, i32
  }
}

</mosaic_0001>

<llo_original>
// kernel: _forward_pallas.1
$region0: #{_forward_pallas.1}
  #allocation0 [shape = 'u32[]', space=smem, size = 0x4, offset = 0x4, fixed_abs, tag = 'smem constant byte address 0x4 - core index']
  #allocation1 [shape = 'u32[72,128]{1,0:T(1,128)}', space=vmem, size = 0x9000, scoped, tag = 'internal scratch']
  %s0 = inlined_call_operand.vmem [shape: f32[2,4,16,16], index: 0, kind: input, shape index: {}]
  %s1 = inlined_call_operand.vmem [shape: f32[2,16,16,16], index: 1, kind: input, shape index: {}]
  %s2 = inlined_call_operand.vmem [shape: f32[3,16,16], index: 2, kind: input, shape index: {}]
  %s3 = inlined_call_operand.vmem [shape: f32[3,16,16], index: 3, kind: input, shape index: {}]
  %s4 = inlined_call_operand.vmem [shape: f32[2,8,16,16], index: 4, kind: output, shape index: {}]
  %s5 = sld [smem:[#allocation0]]
  $region49: #{_forward_pallas.1} parent=0
    _
  %s7 = ssub.s32 1, %s5
  %s8 = scalar_select 0, %s7, %s5
  loop: start=0, step=1, limit=4
  $region2: #{_forward_pallas.1} parent=0 // loop_pre_header
    _
  $region3: #{_forward_pallas.1} parent=0 // loop_header
    %s10 = sphi 0, %s14
    %p11 = scmp.ge.s32.totalorder %s10, 4
    %s20 = sphi 0, %s22
    %s23 = sphi 0, %s20
    %s24 = sphi 0, %s23
    %s40 = sphi 0, %s24
    %s46 = sphi 0, %s48
    %s49 = sphi 0, %s46
    %s50 = sphi 0, %s49
    %s66 = sphi 0, %s50
    %s70 = sphi 0, %s70
    %s72 = sphi 0, %s70
    %s73 = sphi 0, %s72
    %s87 = sphi 0, %s73
    %s91 = sphi 0, %s91
    %s93 = sphi 0, %s91
    %s94 = sphi 0, %s93
    %s108 = sphi 0, %s94
    %s114 = sphi 0, %s116
    %s117 = sphi 0, %s114
    %s118 = sphi 0, %s117
    %s134 = sphi 0, %s118
  $region4: #{_forward_pallas.1} parent=0 // loop_header_branch
    %13 = sbr.rel (%p11) target = $region8
  $region5: #{_forward_pallas.1} parent=0 // loop_body
    %s15 = ssub.s32 %s10, 1
    %s16 = ssub.s32 %s10, 2
    %s17 = sadd.s32 %s10, 1
    %s18 = ssub.s32 %s10, %s17
    %p19 = scmp.eq.s32.totalorder %s18, 0
    %s21 = sadd.s32 %s20, 1
    %s22 = scalar_select %p19, %s20, %s21
    %p25 = pneg %p19
    %p26 = scmp.eq.s32.totalorder %s10, 1
    %p27 = por %p25, %p26
    %p28 = scmp.ne.s32.totalorder %s20, %s23
    %p29 = scmp.eq.s32.totalorder %s10, 0
    %p30 = por %p28, %p29
    %p31 = scmp.ne.s32.totalorder %s20, %s23
    %p32 = scmp.eq.s32.totalorder %s15, 1
    %p33 = por %p31, %p32
    %p34 = scmp.ne.s32.totalorder %s23, %s24
    %p35 = scmp.eq.s32.totalorder %s15, 0
    %p36 = por %p34, %p35
    %p37 = scmp.ne.s32.totalorder %s23, %s24
    %p38 = scmp.eq.s32.totalorder %s16, 1
    %p39 = por %p37, %p38
    %p41 = scmp.ne.s32.totalorder %s24, %s40
    %p42 = scmp.eq.s32.totalorder %s16, 0
    %p43 = por %p41, %p42
    %s44 = ssub.s32 %s10, %s17
    %p45 = scmp.eq.s32.totalorder %s44, 0
    %s47 = sadd.s32 %s46, 1
    %s48 = scalar_select %p45, %s46, %s47
    %p51 = pneg %p45
    %p52 = scmp.eq.s32.totalorder %s10, 1
    %p53 = por %p51, %p52
    %p54 = scmp.ne.s32.totalorder %s46, %s49
    %p55 = scmp.eq.s32.totalorder %s10, 0
    %p56 = por %p54, %p55
    %p57 = scmp.ne.s32.totalorder %s46, %s49
    %p58 = scmp.eq.s32.totalorder %s15, 1
    %p59 = por %p57, %p58
    %p60 = scmp.ne.s32.totalorder %s49, %s50
    %p61 = scmp.eq.s32.totalorder %s15, 0
    %p62 = por %p60, %p61
    %p63 = scmp.ne.s32.totalorder %s49, %s50
    %p64 = scmp.eq.s32.totalorder %s16, 1
    %p65 = por %p63, %p64
    %p67 = scmp.ne.s32.totalorder %s50, %s66
    %p68 = scmp.eq.s32.totalorder %s16, 0
    %p69 = por %p67, %p68
    %s71 = sadd.s32 %s70, 1
    %p74 = scmp.eq.s32.totalorder %s10, 1
    %p75 = scmp.ne.s32.totalorder %s70, %s72
    %p76 = scmp.eq.s32.totalorder %s10, 0
    %p77 = por %p75, %p76
    %p78 = scmp.ne.s32.totalorder %s70, %s72
    %p79 = scmp.eq.s32.totalorder %s15, 1
    %p80 = por %p78, %p79
    %p81 = scmp.ne.s32.totalorder %s72, %s73
    %p82 = scmp.eq.s32.totalorder %s15, 0
    %p83 = por %p81, %p82
    %p84 = scmp.ne.s32.totalorder %s72, %s73
    %p85 = scmp.eq.s32.totalorder %s16, 1
    %p86 = por %p84, %p85
    %p88 = scmp.ne.s32.totalorder %s73, %s87
    %p89 = scmp.eq.s32.totalorder %s16, 0
    %p90 = por %p88, %p89
    %s92 = sadd.s32 %s91, 1
    %p95 = scmp.eq.s32.totalorder %s10, 1
    %p96 = scmp.ne.s32.totalorder %s91, %s93
    %p97 = scmp.eq.s32.totalorder %s10, 0
    %p98 = por %p96, %p97
    %p99 = scmp.ne.s32.totalorder %s91, %s93
    %p100 = scmp.eq.s32.totalorder %s15, 1
    %p101 = por %p99, %p100
    %p102 = scmp.ne.s32.totalorder %s93, %s94
    %p103 = scmp.eq.s32.totalorder %s15, 0
    %p104 = por %p102, %p103
    %p105 = scmp.ne.s32.totalorder %s93, %s94
    %p106 = scmp.eq.s32.totalorder %s16, 1
    %p107 = por %p105, %p106
    %p109 = scmp.ne.s32.totalorder %s94, %s108
    %p110 = scmp.eq.s32.totalorder %s16, 0
    %p111 = por %p109, %p110
    %s112 = ssub.s32 %s10, %s17
    %p113 = scmp.eq.s32.totalorder %s112, 0
    %s115 = sadd.s32 %s114, 1
    %s116 = scalar_select %p113, %s114, %s115
    %p119 = pneg %p113
    %p120 = scmp.eq.s32.totalorder %s10, 1
    %p121 = por %p119, %p120
    %p122 = scmp.ne.s32.totalorder %s114, %s117
    %p123 = scmp.eq.s32.totalorder %s10, 0
    %p124 = por %p122, %p123
    %p125 = scmp.ne.s32.totalorder %s114, %s117
    %p126 = scmp.eq.s32.totalorder %s15, 1
    %p127 = por %p125, %p126
    %p128 = scmp.ne.s32.totalorder %s117, %s118
    %p129 = scmp.eq.s32.totalorder %s15, 0
    %p130 = por %p128, %p129
    %p131 = scmp.ne.s32.totalorder %s117, %s118
    %p132 = scmp.eq.s32.totalorder %s16, 1
    %p133 = por %p131, %p132
    %p135 = scmp.ne.s32.totalorder %s118, %s134
    %p136 = scmp.eq.s32.totalorder %s16, 0
    %p137 = por %p135, %p136
    %p138 = scmp.le.s32.totalorder 1, %s10
    %p139 = scmp.lt.s32.totalorder %s10, 3
    %p140 = pnand %p138, %p139
    %p141 = pneg %p140
    // Predicated region
    $region9: #{_forward_pallas.1} parent=5 // pred_check
      _
    $region10: #{_forward_pallas.1} parent=5 // pred_check_branch
      %143 = sbr.rel (%p140) target = $region12
    $region11: #{_forward_pallas.1} parent=5 // pred_region
      %s144 = ssub.s32 %s10, 1
      // Predicated region
      $region13: #{_forward_pallas.1} parent=11 // pred_check
        %p145 = pneg %p83
      $region14: #{_forward_pallas.1} parent=11 // pred_check_branch
        %147 = sbr.rel (%p145) target = $region16
      $region15: #{_forward_pallas.1} parent=11 // pred_region
        _
      $region16: #{_forward_pallas.1} parent=11 // pred_fallthru
        _
      // Predicated region
      $region17: #{_forward_pallas.1} parent=11 // pred_check
        %p148 = pneg %p104
      $region18: #{_forward_pallas.1} parent=11 // pred_check_branch
        %150 = sbr.rel (%p148) target = $region20
      $region19: #{_forward_pallas.1} parent=11 // pred_region
        _
      $region20: #{_forward_pallas.1} parent=11 // pred_fallthru
        _
    $region12: #{_forward_pallas.1} parent=5 // pred_fallthru
      _
    %p151 = scmp.lt.s32.totalorder %s10, 2
    // Predicated region
    $region21: #{_forward_pallas.1} parent=5 // pred_check
      %p152 = pneg %p151
    $region22: #{_forward_pallas.1} parent=5 // pred_check_branch
      %154 = sbr.rel (%p152) target = $region24
    $region23: #{_forward_pallas.1} parent=5 // pred_region
      // Predicated region
      $region25: #{_forward_pallas.1} parent=23 // pred_check
        %p155 = pneg %p30
      $region26: #{_forward_pallas.1} parent=23 // pred_check_branch
        %157 = sbr.rel (%p155) target = $region28
      $region27: #{_forward_pallas.1} parent=23 // pred_region
        %p158 = scmp.lt.s32.totalorder %s10, 1
        %s159 = scalar_select %p158, %s10, 1
        %s160 = smul.addr %s159, 8
        %s161 = smul.addr %s160, 8
        %s162 = scalar_lea.vmem %s0, %s161
      $region28: #{_forward_pallas.1} parent=23 // pred_fallthru
        _
      // Predicated region
      $region29: #{_forward_pallas.1} parent=23 // pred_check
        %p163 = pneg %p56
      $region30: #{_forward_pallas.1} parent=23 // pred_check_branch
        %165 = sbr.rel (%p163) target = $region32
      $region31: #{_forward_pallas.1} parent=23 // pred_region
        %p166 = scmp.lt.s32.totalorder %s10, 1
        %s167 = scalar_select %p166, %s10, 1
        %s168 = smul.addr %s167, 32
        %s169 = smul.addr %s168, 8
        %s170 = scalar_lea.vmem %s1, %s169
      $region32: #{_forward_pallas.1} parent=23 // pred_fallthru
        _
    $region24: #{_forward_pallas.1} parent=5 // pred_fallthru
      _
    %p171 = scmp.le.s32.totalorder 1, %s10
    %p172 = scmp.lt.s32.totalorder %s10, 3
    %p173 = pnand %p171, %p172
    %p174 = pneg %p173
    // Predicated region
    $region33: #{_forward_pallas.1} parent=5 // pred_check
      _
    $region34: #{_forward_pallas.1} parent=5 // pred_check_branch
      %176 = sbr.rel (%p173) target = $region36
    $region35: #{_forward_pallas.1} parent=5 // pred_region
      %s177 = ssub.s32 %s10, 1
      %p178 = scmp.lt.s32.totalorder %s15, 1
      %s179 = scalar_select %p178, %s15, 1
      %s180 = smul.addr %s179, 8
      %s181 = smul.addr %s180, 8
      %s182 = scalar_lea.vmem %s0, %s181
      %p183 = pneg %p36
      %p184 = pneg %p33
      %p185 = scmp.lt.s32.totalorder %s15, 1
      %s186 = scalar_select %p185, %s15, 1
      %s187 = smul.addr %s186, 32
      %s188 = smul.addr %s187, 8
      %s189 = scalar_lea.vmem %s1, %s188
      %p190 = pneg %p62
      %p191 = pneg %p59
      %p192 = pneg %p83
      %p193 = pneg %p80
      %p194 = pneg %p104
      %p195 = pneg %p101
      %p196 = pneg %p130
      %p197 = pneg %p127
      %p198 = scmp.lt.s32.totalorder %s15, 1
      %s199 = scalar_select %p198, %s15, 1
      %s200 = smul.addr %s199, 16
      %s201 = smul.addr %s200, 8
      %s202 = scalar_lea.vmem %s4, %s201
      %p203 = scmp.lt.s32.totalorder %s15, 1
      %s204 = scalar_select %p203, %s15, 1
      %s205 = smul.addr %s204, 8
      %s206 = smul.addr %s205, 8
      %s207 = scalar_lea.vmem %s0, %s206
      %p208 = scmp.lt.s32.totalorder %s15, 1
      %s209 = scalar_select %p208, %s15, 1
      %s210 = smul.addr %s209, 32
      %s211 = smul.addr %s210, 8
      %s212 = scalar_lea.vmem %s1, %s211
      %p213 = scmp.lt.s32.totalorder %s15, 1
      %s214 = scalar_select %p213, %s15, 1
      %s215 = smul.addr %s214, 16
      %s216 = smul.addr %s215, 8
      %s217 = scalar_lea.vmem %s4, %s216
      %v218 = vld [vmem:[%s207] sm:$0xff]
      %v219 = vld [vmem:[%s207 + $0x8] sm:$0xff]
      %v220 = vld [vmem:[%s207 + $0x10] sm:$0xff]
      %v221 = vld [vmem:[%s207 + $0x18] sm:$0xff]
      %s222 = scalar_lea.vmem %s207, 32
      %v223 = vld [vmem:[%s222] sm:$0xff]
      %v224 = vld [vmem:[%s222 + $0x8] sm:$0xff]
      %v225 = vld [vmem:[%s222 + $0x10] sm:$0xff]
      %v226 = vld [vmem:[%s222 + $0x18] sm:$0xff]
      %v227 = vld [vmem:[%s2] sm:$0xff]
      %v228 = vld [vmem:[%s2 + $0x8] sm:$0xff]
      %s229 = scalar_lea.vmem %s2, 16
      %v230 = vld [vmem:[%s229] sm:$0xff]
      %v231 = vld [vmem:[%s229 + $0x8] sm:$0xff]
      %s232 = scalar_lea.vmem %s2, 32
      %v233 = vld [vmem:[%s232] sm:$0xff]
      %v234 = vld [vmem:[%s232 + $0x8] sm:$0xff]
      %v235 = vld [vmem:[%s3] sm:$0xff]
      %v236 = vld [vmem:[%s3 + $0x8] sm:$0xff]
      %s237 = scalar_lea.vmem %s3, 16
      %v238 = vld [vmem:[%s237] sm:$0xff]
      %v239 = vld [vmem:[%s237 + $0x8] sm:$0xff]
      %s240 = scalar_lea.vmem %s3, 32
      %v241 = vld [vmem:[%s240] sm:$0xff]
      %v242 = vld [vmem:[%s240 + $0x8] sm:$0xff]
      %v243 = vld [vmem:[%s212] sm:$0xff]
      %v244 = vld [vmem:[%s212 + $0x8] sm:$0xff]
      %v245 = vld [vmem:[%s212 + $0x10] sm:$0xff]
      %v246 = vld [vmem:[%s212 + $0x18] sm:$0xff]
      %s247 = scalar_lea.vmem %s212, 32
      %v248 = vld [vmem:[%s247] sm:$0xff]
      %v249 = vld [vmem:[%s247 + $0x8] sm:$0xff]
      %v250 = vld [vmem:[%s247 + $0x10] sm:$0xff]
      %v251 = vld [vmem:[%s247 + $0x18] sm:$0xff]
      %v252 = vmul.f32 %v218, %v243
      %v253 = vmul.f32 %v219, %v244
      %v254 = vmul.f32 %v220, %v245
      %v255 = vmul.f32 %v221, %v246
      %v256 = vmul.f32 %v223, %v248
      %v257 = vmul.f32 %v224, %v249
      %v258 = vmul.f32 %v225, %v250
      %v259 = vmul.f32 %v226, %v251
      %v260 = vsub.f32 %v252, %v256
      %v261 = vsub.f32 %v253, %v257
      %v262 = vsub.f32 %v254, %v258
      %v263 = vsub.f32 %v255, %v259
      %vm264 = vcmask 130048
      %v265 = vsel %vm264, %v260, 0.0
      %v266 = vsel %vm264, %v262, 0.0
      %v267 = vadd.f32 %v265, %v266
      %v268 = vsel %vm264, %v261, 0.0
      %v269 = vsel %vm264, %v263, 0.0
      %v270 = vadd.f32 %v268, %v269
      %v271 = vmul.f32 %v218, %v248
      %v272 = vmul.f32 %v219, %v249
      %v273 = vmul.f32 %v220, %v250
      %v274 = vmul.f32 %v221, %v251
      %v275 = vmul.f32 %v223, %v243
      %v276 = vmul.f32 %v224, %v244
      %v277 = vmul.f32 %v225, %v245
      %v278 = vmul.f32 %v226, %v246
      %v279 = vadd.f32 %v271, %v275
      %v280 = vadd.f32 %v272, %v276
      %v281 = vadd.f32 %v273, %v277
      %v282 = vadd.f32 %v274, %v278
      %v283 = vsel %vm264, %v279, 0.0
      %v284 = vsel %vm264, %v281, 0.0
      %v285 = vadd.f32 %v283, %v284
      %v286 = vsel %vm264, %v280, 0.0
      %v287 = vsel %vm264, %v282, 0.0
      %v288 = vadd.f32 %v286, %v287
      %v289 = vadd.f32 %v267, %v285
      %v290 = vadd.f32 %v270, %v288
      %v292 = vsel %vm264, %v227, 0
      %v295 = vsel %vm264, %v228, 0
      %297 = vmatpush.msra.mxu0 0.0
      %298 = vmatpush.msra.mxu0 0.0
      %299 = vmatpush.msra.mxu0 0.0
      %300 = vmatpush.msra.mxu0 0.0
      %301 = vmatpush.msra.mxu0 0.0
      %302 = vmatpush.msra.mxu0 0.0
      %303 = vmatpush.msra.mxu0 0.0
      %304 = vmatpush.msra.mxu0 0.0
      %305 = vmatpush.msra.mxu0 0.0
      %306 = vmatpush.msra.mxu0 0.0
      %307 = vmatpush.msra.mxu0 0.0
      %308 = vmatpush.msra.mxu0 0.0
      %309 = vmatpush.msra.mxu0 0.0
      %310 = vmatpush.msra.mxu0 0.0
      %311 = vmatpush.msra.mxu0 %v290
      %312 = vmatpush.msra.mxu0 %v289
      %313 = vmatmul.f32.gmra.mxu0 %v292
      %v314 = vpop.f32.mrf.mxu0
      %v315 = vadd.f32 0.0, %v314
      %316 = vmatmul.f32.gmra.mxu0 %v295
      %v317 = vpop.f32.mrf.mxu0
      %v318 = vadd.f32 0.0, %v317
      %319 = vdwg.mxu0
      %v321 = vsel %vm264, %v230, 0
      %v324 = vsel %vm264, %v231, 0
      %326 = vmatpush.msra.mxu0 0.0
      %327 = vmatpush.msra.mxu0 0.0
      %328 = vmatpush.msra.mxu0 0.0
      %329 = vmatpush.msra.mxu0 0.0
      %330 = vmatpush.msra.mxu0 0.0
      %331 = vmatpush.msra.mxu0 0.0
      %332 = vmatpush.msra.mxu0 0.0
      %333 = vmatpush.msra.mxu0 0.0
      %334 = vmatpush.msra.mxu0 0.0
      %335 = vmatpush.msra.mxu0 0.0
      %336 = vmatpush.msra.mxu0 0.0
      %337 = vmatpush.msra.mxu0 0.0
      %338 = vmatpush.msra.mxu0 0.0
      %339 = vmatpush.msra.mxu0 0.0
      %340 = vmatpush.msra.mxu0 %v288
      %341 = vmatpush.msra.mxu0 %v285
      %342 = vmatmul.f32.gmra.mxu0 %v321
      %v343 = vpop.f32.mrf.mxu0
      %v344 = vadd.f32 0.0, %v343
      %345 = vmatmul.f32.gmra.mxu0 %v324
      %v346 = vpop.f32.mrf.mxu0
      %v347 = vadd.f32 0.0, %v346
      %348 = vdwg.mxu0
      %v350 = vsel %vm264, %v233, 0
      %v353 = vsel %vm264, %v234, 0
      %355 = vmatpush.msra.mxu0 0.0
      %356 = vmatpush.msra.mxu0 0.0
      %357 = vmatpush.msra.mxu0 0.0
      %358 = vmatpush.msra.mxu0 0.0
      %359 = vmatpush.msra.mxu0 0.0
      %360 = vmatpush.msra.mxu0 0.0
      %361 = vmatpush.msra.mxu0 0.0
      %362 = vmatpush.msra.mxu0 0.0
      %363 = vmatpush.msra.mxu0 0.0
      %364 = vmatpush.msra.mxu0 0.0
      %365 = vmatpush.msra.mxu0 0.0
      %366 = vmatpush.msra.mxu0 0.0
      %367 = vmatpush.msra.mxu0 0.0
      %368 = vmatpush.msra.mxu0 0.0
      %369 = vmatpush.msra.mxu0 %v270
      %370 = vmatpush.msra.mxu0 %v267
      %371 = vmatmul.f32.gmra.mxu0 %v350
      %v372 = vpop.f32.mrf.mxu0
      %v373 = vadd.f32 0.0, %v372
      %374 = vmatmul.f32.gmra.mxu0 %v353
      %v375 = vpop.f32.mrf.mxu0
      %v376 = vadd.f32 0.0, %v375
      %377 = vdwg.mxu0
      %v378 = vsub.f32 %v315, %v344
      %v379 = vsub.f32 %v318, %v347
      %v380 = vadd.f32 %v315, %v373
      %v381 = vadd.f32 %v318, %v376
      %s382 = scalar_lea.vmem %s212, 64
      %v383 = vld [vmem:[%s382] sm:$0xff]
      %v384 = vld [vmem:[%s382 + $0x8] sm:$0xff]
      %v385 = vld [vmem:[%s382 + $0x10] sm:$0xff]
      %v386 = vld [vmem:[%s382 + $0x18] sm:$0xff]
      %s387 = scalar_lea.vmem %s212, 96
      %v388 = vld [vmem:[%s387] sm:$0xff]
      %v389 = vld [vmem:[%s387 + $0x8] sm:$0xff]
      %v390 = vld [vmem:[%s387 + $0x10] sm:$0xff]
      %v391 = vld [vmem:[%s387 + $0x18] sm:$0xff]
      %v392 = vmul.f32 %v218, %v383
      %v393 = vmul.f32 %v219, %v384
      %v394 = vmul.f32 %v220, %v385
      %v395 = vmul.f32 %v221, %v386
      %v396 = vmul.f32 %v223, %v388
      %v397 = vmul.f32 %v224, %v389
      %v398 = vmul.f32 %v225, %v390
      %v399 = vmul.f32 %v226, %v391
      %v400 = vsub.f32 %v392, %v396
      %v401 = vsub.f32 %v393, %v397
      %v402 = vsub.f32 %v394, %v398
      %v403 = vsub.f32 %v395, %v399
      %v404 = vsel %vm264, %v400, 0.0
      %v405 = vsel %vm264, %v402, 0.0
      %v406 = vadd.f32 %v404, %v405
      %v407 = vsel %vm264, %v401, 0.0
      %v408 = vsel %vm264, %v403, 0.0
      %v409 = vadd.f32 %v407, %v408
      %v410 = vmul.f32 %v218, %v388
      %v411 = vmul.f32 %v219, %v389
      %v412 = vmul.f32 %v220, %v390
      %v413 = vmul.f32 %v221, %v391
      %v414 = vmul.f32 %v223, %v383
      %v415 = vmul.f32 %v224, %v384
      %v416 = vmul.f32 %v225, %v385
      %v417 = vmul.f32 %v226, %v386
      %v418 = vadd.f32 %v410, %v414
      %v419 = vadd.f32 %v411, %v415
      %v420 = vadd.f32 %v412, %v416
      %v421 = vadd.f32 %v413, %v417
      %v422 = vsel %vm264, %v418, 0.0
      %v423 = vsel %vm264, %v420, 0.0
      %v424 = vadd.f32 %v422, %v423
      %v425 = vsel %vm264, %v419, 0.0
      %v426 = vsel %vm264, %v421, 0.0
      %v427 = vadd.f32 %v425, %v426
      %v428 = vadd.f32 %v406, %v424
      %v429 = vadd.f32 %v409, %v427
      %430 = vmatpush.msra.mxu0 0.0
      %431 = vmatpush.msra.mxu0 0.0
      %432 = vmatpush.msra.mxu0 0.0
      %433 = vmatpush.msra.mxu0 0.0
      %434 = vmatpush.msra.mxu0 0.0
      %435 = vmatpush.msra.mxu0 0.0
      %436 = vmatpush.msra.mxu0 0.0
      %437 = vmatpush.msra.mxu0 0.0
      %438 = vmatpush.msra.mxu0 0.0
      %439 = vmatpush.msra.mxu0 0.0
      %440 = vmatpush.msra.mxu0 0.0
      %441 = vmatpush.msra.mxu0 0.0
      %442 = vmatpush.msra.mxu0 0.0
      %443 = vmatpush.msra.mxu0 0.0
      %444 = vmatpush.msra.mxu0 %v429
      %445 = vmatpush.msra.mxu0 %v428
      %446 = vmatmul.f32.gmra.mxu0 %v292
      %v447 = vpop.f32.mrf.mxu0
      %v448 = vadd.f32 0.0, %v447
      %449 = vmatmul.f32.gmra.mxu0 %v295
      %v450 = vpop.f32.mrf.mxu0
      %v451 = vadd.f32 0.0, %v450
      %452 = vdwg.mxu0
      %453 = vmatpush.msra.mxu0 0.0
      %454 = vmatpush.msra.mxu0 0.0
      %455 = vmatpush.msra.mxu0 0.0
      %456 = vmatpush.msra.mxu0 0.0
      %457 = vmatpush.msra.mxu0 0.0
      %458 = vmatpush.msra.mxu0 0.0
      %459 = vmatpush.msra.mxu0 0.0
      %460 = vmatpush.msra.mxu0 0.0
      %461 = vmatpush.msra.mxu0 0.0
      %462 = vmatpush.msra.mxu0 0.0
      %463 = vmatpush.msra.mxu0 0.0
      %464 = vmatpush.msra.mxu0 0.0
      %465 = vmatpush.msra.mxu0 0.0
      %466 = vmatpush.msra.mxu0 0.0
      %467 = vmatpush.msra.mxu0 %v427
      %468 = vmatpush.msra.mxu0 %v424
      %469 = vmatmul.f32.gmra.mxu0 %v321
      %v470 = vpop.f32.mrf.mxu0
      %v471 = vadd.f32 0.0, %v470
      %472 = vmatmul.f32.gmra.mxu0 %v324
      %v473 = vpop.f32.mrf.mxu0
      %v474 = vadd.f32 0.0, %v473
      %475 = vdwg.mxu0
      %476 = vmatpush.msra.mxu0 0.0
      %477 = vmatpush.msra.mxu0 0.0
      %478 = vmatpush.msra.mxu0 0.0
      %479 = vmatpush.msra.mxu0 0.0
      %480 = vmatpush.msra.mxu0 0.0
      %481 = vmatpush.msra.mxu0 0.0
      %482 = vmatpush.msra.mxu0 0.0
      %483 = vmatpush.msra.mxu0 0.0
      %484 = vmatpush.msra.mxu0 0.0
      %485 = vmatpush.msra.mxu0 0.0
      %486 = vmatpush.msra.mxu0 0.0
      %487 = vmatpush.msra.mxu0 0.0
      %488 = vmatpush.msra.mxu0 0.0
      %489 = vmatpush.msra.mxu0 0.0
      %490 = vmatpush.msra.mxu0 %v409
      %491 = vmatpush.msra.mxu0 %v406
      %492 = vmatmul.f32.gmra.mxu0 %v350
      %v493 = vpop.f32.mrf.mxu0
      %v494 = vadd.f32 0.0, %v493
      %495 = vmatmul.f32.gmra.mxu0 %v353
      %v496 = vpop.f32.mrf.mxu0
      %v497 = vadd.f32 0.0, %v496
      %498 = vdwg.mxu0
      %v499 = vsub.f32 %v448, %v471
      %v500 = vsub.f32 %v451, %v474
      %v501 = vadd.f32 %v448, %v494
      %v502 = vadd.f32 %v451, %v497
      %s503 = scalar_lea.vmem %s212, 128
      %v504 = vld [vmem:[%s503] sm:$0xff]
      %v505 = vld [vmem:[%s503 + $0x8] sm:$0xff]
      %v506 = vld [vmem:[%s503 + $0x10] sm:$0xff]
      %v507 = vld [vmem:[%s503 + $0x18] sm:$0xff]
      %s508 = scalar_lea.vmem %s212, 160
      %v509 = vld [vmem:[%s508] sm:$0xff]
      %v510 = vld [vmem:[%s508 + $0x8] sm:$0xff]
      %v511 = vld [vmem:[%s508 + $0x10] sm:$0xff]
      %v512 = vld [vmem:[%s508 + $0x18] sm:$0xff]
      %v513 = vmul.f32 %v218, %v504
      %v514 = vmul.f32 %v219, %v505
      %v515 = vmul.f32 %v220, %v506
      %v516 = vmul.f32 %v221, %v507
      %v517 = vmul.f32 %v223, %v509
      %v518 = vmul.f32 %v224, %v510
      %v519 = vmul.f32 %v225, %v511
      %v520 = vmul.f32 %v226, %v512
      %v521 = vsub.f32 %v513, %v517
      %v522 = vsub.f32 %v514, %v518
      %v523 = vsub.f32 %v515, %v519
      %v524 = vsub.f32 %v516, %v520
      %v525 = vsel %vm264, %v521, 0.0
      %v526 = vsel %vm264, %v523, 0.0
      %v527 = vadd.f32 %v525, %v526
      %v528 = vsel %vm264, %v522, 0.0
      %v529 = vsel %vm264, %v524, 0.0
      %v530 = vadd.f32 %v528, %v529
      %v531 = vmul.f32 %v218, %v509
      %v532 = vmul.f32 %v219, %v510
      %v533 = vmul.f32 %v220, %v511
      %v534 = vmul.f32 %v221, %v512
      %v535 = vmul.f32 %v223, %v504
      %v536 = vmul.f32 %v224, %v505
      %v537 = vmul.f32 %v225, %v506
      %v538 = vmul.f32 %v226, %v507
      %v539 = vadd.f32 %v531, %v535
      %v540 = vadd.f32 %v532, %v536
      %v541 = vadd.f32 %v533, %v537
      %v542 = vadd.f32 %v534, %v538
      %v543 = vsel %vm264, %v539, 0.0
      %v544 = vsel %vm264, %v541, 0.0
      %v545 = vadd.f32 %v543, %v544
      %v546 = vsel %vm264, %v540, 0.0
      %v547 = vsel %vm264, %v542, 0.0
      %v548 = vadd.f32 %v546, %v547
      %v549 = vadd.f32 %v527, %v545
      %v550 = vadd.f32 %v530, %v548
      %551 = vmatpush.msra.mxu0 0.0
      %552 = vmatpush.msra.mxu0 0.0
      %553 = vmatpush.msra.mxu0 0.0
      %554 = vmatpush.msra.mxu0 0.0
      %555 = vmatpush.msra.mxu0 0.0
      %556 = vmatpush.msra.mxu0 0.0
      %557 = vmatpush.msra.mxu0 0.0
      %558 = vmatpush.msra.mxu0 0.0
      %559 = vmatpush.msra.mxu0 0.0
      %560 = vmatpush.msra.mxu0 0.0
      %561 = vmatpush.msra.mxu0 0.0
      %562 = vmatpush.msra.mxu0 0.0
      %563 = vmatpush.msra.mxu0 0.0
      %564 = vmatpush.msra.mxu0 0.0
      %565 = vmatpush.msra.mxu0 %v550
      %566 = vmatpush.msra.mxu0 %v549
      %567 = vmatmul.f32.gmra.mxu0 %v292
      %v568 = vpop.f32.mrf.mxu0
      %v569 = vadd.f32 0.0, %v568
      %570 = vmatmul.f32.gmra.mxu0 %v295
      %v571 = vpop.f32.mrf.mxu0
      %v572 = vadd.f32 0.0, %v571
      %573 = vdwg.mxu0
      %574 = vmatpush.msra.mxu0 0.0
      %575 = vmatpush.msra.mxu0 0.0
      %576 = vmatpush.msra.mxu0 0.0
      %577 = vmatpush.msra.mxu0 0.0
      %578 = vmatpush.msra.mxu0 0.0
      %579 = vmatpush.msra.mxu0 0.0
      %580 = vmatpush.msra.mxu0 0.0
      %581 = vmatpush.msra.mxu0 0.0
      %582 = vmatpush.msra.mxu0 0.0
      %583 = vmatpush.msra.mxu0 0.0
      %584 = vmatpush.msra.mxu0 0.0
      %585 = vmatpush.msra.mxu0 0.0
      %586 = vmatpush.msra.mxu0 0.0
      %587 = vmatpush.msra.mxu0 0.0
      %588 = vmatpush.msra.mxu0 %v548
      %589 = vmatpush.msra.mxu0 %v545
      %590 = vmatmul.f32.gmra.mxu0 %v321
      %v591 = vpop.f32.mrf.mxu0
      %v592 = vadd.f32 0.0, %v591
      %593 = vmatmul.f32.gmra.mxu0 %v324
      %v594 = vpop.f32.mrf.mxu0
      %v595 = vadd.f32 0.0, %v594
      %596 = vdwg.mxu0
      %597 = vmatpush.msra.mxu0 0.0
      %598 = vmatpush.msra.mxu0 0.0
      %599 = vmatpush.msra.mxu0 0.0
      %600 = vmatpush.msra.mxu0 0.0
      %601 = vmatpush.msra.mxu0 0.0
      %602 = vmatpush.msra.mxu0 0.0
      %603 = vmatpush.msra.mxu0 0.0
      %604 = vmatpush.msra.mxu0 0.0
      %605 = vmatpush.msra.mxu0 0.0
      %606 = vmatpush.msra.mxu0 0.0
      %607 = vmatpush.msra.mxu0 0.0
      %608 = vmatpush.msra.mxu0 0.0
      %609 = vmatpush.msra.mxu0 0.0
      %610 = vmatpush.msra.mxu0 0.0
      %611 = vmatpush.msra.mxu0 %v530
      %612 = vmatpush.msra.mxu0 %v527
      %613 = vmatmul.f32.gmra.mxu0 %v350
      %v614 = vpop.f32.mrf.mxu0
      %v615 = vadd.f32 0.0, %v614
      %616 = vmatmul.f32.gmra.mxu0 %v353
      %v617 = vpop.f32.mrf.mxu0
      %v618 = vadd.f32 0.0, %v617
      %619 = vdwg.mxu0
      %v620 = vsub.f32 %v569, %v592
      %v621 = vsub.f32 %v572, %v595
      %v622 = vadd.f32 %v569, %v615
      %v623 = vadd.f32 %v572, %v618
      %s624 = scalar_lea.vmem %s212, 192
      %v625 = vld [vmem:[%s624] sm:$0xff]
      %v626 = vld [vmem:[%s624 + $0x8] sm:$0xff]
      %v627 = vld [vmem:[%s624 + $0x10] sm:$0xff]
      %v628 = vld [vmem:[%s624 + $0x18] sm:$0xff]
      %s629 = scalar_lea.vmem %s212, 224
      %v630 = vld [vmem:[%s629] sm:$0xff]
      %v631 = vld [vmem:[%s629 + $0x8] sm:$0xff]
      %v632 = vld [vmem:[%s629 + $0x10] sm:$0xff]
      %v633 = vld [vmem:[%s629 + $0x18] sm:$0xff]
      %v634 = vmul.f32 %v218, %v625
      %v635 = vmul.f32 %v219, %v626
      %v636 = vmul.f32 %v220, %v627
      %v637 = vmul.f32 %v221, %v628
      %v638 = vmul.f32 %v223, %v630
      %v639 = vmul.f32 %v224, %v631
      %v640 = vmul.f32 %v225, %v632
      %v641 = vmul.f32 %v226, %v633
      %v642 = vsub.f32 %v634, %v638
      %v643 = vsub.f32 %v635, %v639
      %v644 = vsub.f32 %v636, %v640
      %v645 = vsub.f32 %v637, %v641
      %v646 = vsel %vm264, %v642, 0.0
      %v647 = vsel %vm264, %v644, 0.0
      %v648 = vadd.f32 %v646, %v647
      %v649 = vsel %vm264, %v643, 0.0
      %v650 = vsel %vm264, %v645, 0.0
      %v651 = vadd.f32 %v649, %v650
      %v652 = vmul.f32 %v218, %v630
      %v653 = vmul.f32 %v219, %v631
      %v654 = vmul.f32 %v220, %v632
      %v655 = vmul.f32 %v221, %v633
      %v656 = vmul.f32 %v223, %v625
      %v657 = vmul.f32 %v224, %v626
      %v658 = vmul.f32 %v225, %v627
      %v659 = vmul.f32 %v226, %v628
      %v660 = vadd.f32 %v652, %v656
      %v661 = vadd.f32 %v653, %v657
      %v662 = vadd.f32 %v654, %v658
      %v663 = vadd.f32 %v655, %v659
      %v664 = vsel %vm264, %v660, 0.0
      %v665 = vsel %vm264, %v662, 0.0
      %v666 = vadd.f32 %v664, %v665
      %v667 = vsel %vm264, %v661, 0.0
      %v668 = vsel %vm264, %v663, 0.0
      %v669 = vadd.f32 %v667, %v668
      %v670 = vadd.f32 %v648, %v666
      %v671 = vadd.f32 %v651, %v669
      %672 = vmatpush.msra.mxu0 0.0
      %673 = vmatpush.msra.mxu0 0.0
      %674 = vmatpush.msra.mxu0 0.0
      %675 = vmatpush.msra.mxu0 0.0
      %676 = vmatpush.msra.mxu0 0.0
      %677 = vmatpush.msra.mxu0 0.0
      %678 = vmatpush.msra.mxu0 0.0
      %679 = vmatpush.msra.mxu0 0.0
      %680 = vmatpush.msra.mxu0 0.0
      %681 = vmatpush.msra.mxu0 0.0
      %682 = vmatpush.msra.mxu0 0.0
      %683 = vmatpush.msra.mxu0 0.0
      %684 = vmatpush.msra.mxu0 0.0
      %685 = vmatpush.msra.mxu0 0.0
      %686 = vmatpush.msra.mxu0 %v671
      %687 = vmatpush.msra.mxu0 %v670
      %688 = vmatmul.f32.gmra.mxu0 %v292
      %v689 = vpop.f32.mrf.mxu0
      %v690 = vadd.f32 0.0, %v689
      %691 = vmatmul.f32.gmra.mxu0 %v295
      %v692 = vpop.f32.mrf.mxu0
      %v693 = vadd.f32 0.0, %v692
      %694 = vdwg.mxu0
      %695 = vmatpush.msra.mxu0 0.0
      %696 = vmatpush.msra.mxu0 0.0
      %697 = vmatpush.msra.mxu0 0.0
      %698 = vmatpush.msra.mxu0 0.0
      %699 = vmatpush.msra.mxu0 0.0
      %700 = vmatpush.msra.mxu0 0.0
      %701 = vmatpush.msra.mxu0 0.0
      %702 = vmatpush.msra.mxu0 0.0
      %703 = vmatpush.msra.mxu0 0.0
      %704 = vmatpush.msra.mxu0 0.0
      %705 = vmatpush.msra.mxu0 0.0
      %706 = vmatpush.msra.mxu0 0.0
      %707 = vmatpush.msra.mxu0 0.0
      %708 = vmatpush.msra.mxu0 0.0
      %709 = vmatpush.msra.mxu0 %v669
      %710 = vmatpush.msra.mxu0 %v666
      %711 = vmatmul.f32.gmra.mxu0 %v321
      %v712 = vpop.f32.mrf.mxu0
      %v713 = vadd.f32 0.0, %v712
      %714 = vmatmul.f32.gmra.mxu0 %v324
      %v715 = vpop.f32.mrf.mxu0
      %v716 = vadd.f32 0.0, %v715
      %717 = vdwg.mxu0
      %718 = vmatpush.msra.mxu0 0.0
      %719 = vmatpush.msra.mxu0 0.0
      %720 = vmatpush.msra.mxu0 0.0
      %721 = vmatpush.msra.mxu0 0.0
      %722 = vmatpush.msra.mxu0 0.0
      %723 = vmatpush.msra.mxu0 0.0
      %724 = vmatpush.msra.mxu0 0.0
      %725 = vmatpush.msra.mxu0 0.0
      %726 = vmatpush.msra.mxu0 0.0
      %727 = vmatpush.msra.mxu0 0.0
      %728 = vmatpush.msra.mxu0 0.0
      %729 = vmatpush.msra.mxu0 0.0
      %730 = vmatpush.msra.mxu0 0.0
      %731 = vmatpush.msra.mxu0 0.0
      %732 = vmatpush.msra.mxu0 %v651
      %733 = vmatpush.msra.mxu0 %v648
      %734 = vmatmul.f32.gmra.mxu0 %v350
      %v735 = vpop.f32.mrf.mxu0
      %v736 = vadd.f32 0.0, %v735
      %737 = vmatmul.f32.gmra.mxu0 %v353
      %v738 = vpop.f32.mrf.mxu0
      %v739 = vadd.f32 0.0, %v738
      %740 = vdwg.mxu0
      %v741 = vsub.f32 %v690, %v713
      %v742 = vsub.f32 %v693, %v716
      %v743 = vadd.f32 %v690, %v736
      %v744 = vadd.f32 %v693, %v739
      %v745 = vadd.f32 %v378, %v380
      %v746 = vadd.f32 %v379, %v381
      %v747 = vadd.f32 %v499, %v501
      %v748 = vadd.f32 %v500, %v502
      %v749 = vadd.f32 %v620, %v622
      %v750 = vadd.f32 %v621, %v623
      %v751 = vadd.f32 %v741, %v743
      %v752 = vadd.f32 %v742, %v744
      %v754 = vsel %vm264, %v745, 0
      %v757 = vsel %vm264, %v746, 0
      %v760 = vsel %vm264, %v747, 0
      %v763 = vsel %vm264, %v748, 0
      %v766 = vsel %vm264, %v749, 0
      %v769 = vsel %vm264, %v750, 0
      %v772 = vsel %vm264, %v751, 0
      %v775 = vsel %vm264, %v752, 0
      %777 = vmatpush.msra.mxu0 0.0
      %778 = vmatpush.msra.mxu0 0.0
      %779 = vmatpush.msra.mxu0 0.0
      %780 = vmatpush.msra.mxu0 0.0
      %781 = vmatpush.msra.mxu0 0.0
      %782 = vmatpush.msra.mxu0 0.0
      %783 = vmatpush.msra.mxu0 0.0
      %784 = vmatpush.msra.mxu0 0.0
      %785 = vmatpush.msra.mxu0 0.0
      %786 = vmatpush.msra.mxu0 0.0
      %787 = vmatpush.msra.mxu0 0.0
      %788 = vmatpush.msra.mxu0 0.0
      %789 = vmatpush.msra.mxu0 0.0
      %790 = vmatpush.msra.mxu0 0.0
      %791 = vmatpush.msra.mxu0 %v236
      %792 = vmatpush.msra.mxu0 %v235
      %793 = vmatmul.f32.gmra.mxu0 %v754
      %v794 = vpop.f32.mrf.mxu0
      %v795 = vadd.f32 0.0, %v794
      %796 = vmatmul.f32.gmra.mxu0 %v757
      %v797 = vpop.f32.mrf.mxu0
      %v798 = vadd.f32 0.0, %v797
      %799 = vmatmul.f32.gmra.mxu0 %v760
      %v800 = vpop.f32.mrf.mxu0
      %v801 = vadd.f32 0.0, %v800
      %802 = vmatmul.f32.gmra.mxu0 %v763
      %v803 = vpop.f32.mrf.mxu0
      %v804 = vadd.f32 0.0, %v803
      %805 = vmatmul.f32.gmra.mxu0 %v766
      %v806 = vpop.f32.mrf.mxu0
      %v807 = vadd.f32 0.0, %v806
      %808 = vmatmul.f32.gmra.mxu0 %v769
      %v809 = vpop.f32.mrf.mxu0
      %v810 = vadd.f32 0.0, %v809
      %811 = vmatmul.f32.gmra.mxu0 %v772
      %v812 = vpop.f32.mrf.mxu0
      %v813 = vadd.f32 0.0, %v812
      %814 = vmatmul.f32.gmra.mxu0 %v775
      %v815 = vpop.f32.mrf.mxu0
      %v816 = vadd.f32 0.0, %v815
      %817 = vdwg.mxu0
      %v819 = vsel %vm264, %v380, 0
      %v822 = vsel %vm264, %v381, 0
      %v825 = vsel %vm264, %v501, 0
      %v828 = vsel %vm264, %v502, 0
      %v831 = vsel %vm264, %v622, 0
      %v834 = vsel %vm264, %v623, 0
      %v837 = vsel %vm264, %v743, 0
      %v840 = vsel %vm264, %v744, 0
      %842 = vmatpush.msra.mxu0 0.0
      %843 = vmatpush.msra.mxu0 0.0
      %844 = vmatpush.msra.mxu0 0.0
      %845 = vmatpush.msra.mxu0 0.0
      %846 = vmatpush.msra.mxu0 0.0
      %847 = vmatpush.msra.mxu0 0.0
      %848 = vmatpush.msra.mxu0 0.0
      %849 = vmatpush.msra.mxu0 0.0
      %850 = vmatpush.msra.mxu0 0.0
      %851 = vmatpush.msra.mxu0 0.0
      %852 = vmatpush.msra.mxu0 0.0
      %853 = vmatpush.msra.mxu0 0.0
      %854 = vmatpush.msra.mxu0 0.0
      %855 = vmatpush.msra.mxu0 0.0
      %856 = vmatpush.msra.mxu0 %v239
      %857 = vmatpush.msra.mxu0 %v238
      %858 = vmatmul.f32.gmra.mxu0 %v819
      %v859 = vpop.f32.mrf.mxu0
      %v860 = vadd.f32 0.0, %v859
      %861 = vmatmul.f32.gmra.mxu0 %v822
      %v862 = vpop.f32.mrf.mxu0
      %v863 = vadd.f32 0.0, %v862
      %864 = vmatmul.f32.gmra.mxu0 %v825
      %v865 = vpop.f32.mrf.mxu0
      %v866 = vadd.f32 0.0, %v865
      %867 = vmatmul.f32.gmra.mxu0 %v828
      %v868 = vpop.f32.mrf.mxu0
      %v869 = vadd.f32 0.0, %v868
      %870 = vmatmul.f32.gmra.mxu0 %v831
      %v871 = vpop.f32.mrf.mxu0
      %v872 = vadd.f32 0.0, %v871
      %873 = vmatmul.f32.gmra.mxu0 %v834
      %v874 = vpop.f32.mrf.mxu0
      %v875 = vadd.f32 0.0, %v874
      %876 = vmatmul.f32.gmra.mxu0 %v837
      %v877 = vpop.f32.mrf.mxu0
      %v878 = vadd.f32 0.0, %v877
      %879 = vmatmul.f32.gmra.mxu0 %v840
      %v880 = vpop.f32.mrf.mxu0
      %v881 = vadd.f32 0.0, %v880
      %882 = vdwg.mxu0
      %v884 = vsel %vm264, %v378, 0
      %v887 = vsel %vm264, %v379, 0
      %v890 = vsel %vm264, %v499, 0
      %v893 = vsel %vm264, %v500, 0
      %v896 = vsel %vm264, %v620, 0
      %v899 = vsel %vm264, %v621, 0
      %v902 = vsel %vm264, %v741, 0
      %v905 = vsel %vm264, %v742, 0
      %907 = vmatpush.msra.mxu0 0.0
      %908 = vmatpush.msra.mxu0 0.0
      %909 = vmatpush.msra.mxu0 0.0
      %910 = vmatpush.msra.mxu0 0.0
      %911 = vmatpush.msra.mxu0 0.0
      %912 = vmatpush.msra.mxu0 0.0
      %913 = vmatpush.msra.mxu0 0.0
      %914 = vmatpush.msra.mxu0 0.0
      %915 = vmatpush.msra.mxu0 0.0
      %916 = vmatpush.msra.mxu0 0.0
      %917 = vmatpush.msra.mxu0 0.0
      %918 = vmatpush.msra.mxu0 0.0
      %919 = vmatpush.msra.mxu0 0.0
      %920 = vmatpush.msra.mxu0 0.0
      %921 = vmatpush.msra.mxu0 %v242
      %922 = vmatpush.msra.mxu0 %v241
      %923 = vmatmul.f32.gmra.mxu0 %v884
      %v924 = vpop.f32.mrf.mxu0
      %v925 = vadd.f32 0.0, %v924
      %926 = vmatmul.f32.gmra.mxu0 %v887
      %v927 = vpop.f32.mrf.mxu0
      %v928 = vadd.f32 0.0, %v927
      %929 = vmatmul.f32.gmra.mxu0 %v890
      %v930 = vpop.f32.mrf.mxu0
      %v931 = vadd.f32 0.0, %v930
      %932 = vmatmul.f32.gmra.mxu0 %v893
      %v933 = vpop.f32.mrf.mxu0
      %v934 = vadd.f32 0.0, %v933
      %935 = vmatmul.f32.gmra.mxu0 %v896
      %v936 = vpop.f32.mrf.mxu0
      %v937 = vadd.f32 0.0, %v936
      %938 = vmatmul.f32.gmra.mxu0 %v899
      %v939 = vpop.f32.mrf.mxu0
      %v940 = vadd.f32 0.0, %v939
      %941 = vmatmul.f32.gmra.mxu0 %v902
      %v942 = vpop.f32.mrf.mxu0
      %v943 = vadd.f32 0.0, %v942
      %944 = vmatmul.f32.gmra.mxu0 %v905
      %v945 = vpop.f32.mrf.mxu0
      %v946 = vadd.f32 0.0, %v945
      %947 = vdwg.mxu0
      %v948 = vsub.f32 %v795, %v860
      %v949 = vsub.f32 %v798, %v863
      %v950 = vsub.f32 %v801, %v866
      %v951 = vsub.f32 %v804, %v869
      %v952 = vsub.f32 %v807, %v872
      %v953 = vsub.f32 %v810, %v875
      %v954 = vsub.f32 %v813, %v878
      %v955 = vsub.f32 %v816, %v881
      %956 = vst.msk [vmem:[%s217] sm:$0xff] %vm264, %v948
      %957 = vst.msk [vmem:[%s217 + $0x8] sm:$0xff] %vm264, %v949
      %958 = vst.msk [vmem:[%s217 + $0x10] sm:$0xff] %vm264, %v950
      %959 = vst.msk [vmem:[%s217 + $0x18] sm:$0xff] %vm264, %v951
      %960 = vst.msk [vmem:[%s217 + $0x20] sm:$0xff] %vm264, %v952
      %961 = vst.msk [vmem:[%s217 + $0x28] sm:$0xff] %vm264, %v953
      %962 = vst.msk [vmem:[%s217 + $0x30] sm:$0xff] %vm264, %v954
      %963 = vst.msk [vmem:[%s217 + $0x38] sm:$0xff] %vm264, %v955
      %v964 = vadd.f32 %v795, %v925
      %v965 = vadd.f32 %v798, %v928
      %v966 = vadd.f32 %v801, %v931
      %v967 = vadd.f32 %v804, %v934
      %v968 = vadd.f32 %v807, %v937
      %v969 = vadd.f32 %v810, %v940
      %v970 = vadd.f32 %v813, %v943
      %v971 = vadd.f32 %v816, %v946
      %s972 = scalar_lea.vmem %s217, 64
      %973 = vst.msk [vmem:[%s972] sm:$0xff] %vm264, %v964
      %974 = vst.msk [vmem:[%s972 + $0x8] sm:$0xff] %vm264, %v965
      %975 = vst.msk [vmem:[%s972 + $0x10] sm:$0xff] %vm264, %v966
      %976 = vst.msk [vmem:[%s972 + $0x18] sm:$0xff] %vm264, %v967
      %977 = vst.msk [vmem:[%s972 + $0x20] sm:$0xff] %vm264, %v968
      %978 = vst.msk [vmem:[%s972 + $0x28] sm:$0xff] %vm264, %v969
      %979 = vst.msk [vmem:[%s972 + $0x30] sm:$0xff] %vm264, %v970
      %980 = vst.msk [vmem:[%s972 + $0x38] sm:$0xff] %vm264, %v971
      %p981 = scmp.lt.s32.totalorder %s15, 1
      %s982 = scalar_select %p981, %s15, 1
      %s983 = smul.addr %s982, 16
      %s984 = smul.addr %s983, 8
      %s985 = scalar_lea.vmem %s4, %s984
      // Predicated region
      $region37: #{_forward_pallas.1} parent=35 // pred_check
        %p986 = pneg %p127
      $region38: #{_forward_pallas.1} parent=35 // pred_check_branch
        %988 = sbr.rel (%p986) target = $region40
      $region39: #{_forward_pallas.1} parent=35 // pred_region
        _
      $region40: #{_forward_pallas.1} parent=35 // pred_fallthru
        _
    $region36: #{_forward_pallas.1} parent=5 // pred_fallthru
      _
    %p989 = scmp.le.s32.totalorder 2, %s10
    // Predicated region
    $region41: #{_forward_pallas.1} parent=5 // pred_check
      %p990 = pneg %p989
    $region42: #{_forward_pallas.1} parent=5 // pred_check_branch
      %992 = sbr.rel (%p990) target = $region44
    $region43: #{_forward_pallas.1} parent=5 // pred_region
      %s993 = ssub.s32 %s10, 2
      // Predicated region
      $region45: #{_forward_pallas.1} parent=43 // pred_check
        %p994 = pneg %p133
      $region46: #{_forward_pallas.1} parent=43 // pred_check_branch
        %996 = sbr.rel (%p994) target = $region48
      $region47: #{_forward_pallas.1} parent=43 // pred_region
        %p997 = scmp.lt.s32.totalorder %s16, 1
        %s998 = scalar_select %p997, %s16, 1
        %s999 = smul.addr %s998, 16
        %s1000 = smul.addr %s999, 8
        %s1001 = scalar_lea.vmem %s4, %s1000
      $region48: #{_forward_pallas.1} parent=43 // pred_fallthru
        _
    $region44: #{_forward_pallas.1} parent=5 // pred_fallthru
      _
  $region6: #{_forward_pallas.1} parent=0 // loop_footer
    %s14 = sadd.s32 1, %s10
  $region7: #{_forward_pallas.1} parent=0 // loop_footer_branch
    %9 = sbr.rel target = $region3
  $region8: #{_forward_pallas.1} parent=0 // loop_exit
    _

</llo_original>
